<compile_context>
chip_gen: v5e
topology: v5e:2x2
jax: 0.10.0
libtpu: 0.0.40
codegen_flags: <defaults>
</compile_context>

<pallas_src>
import functools

import jax
import jax.numpy as jnp
from jax import lax
from jax.experimental import pallas as pl
from jax.experimental.pallas import tpu as pltpu


_MAX_TILE_B = 8192   # batch rows per grid step (multiple of 8/16, VMEM-budgeted below)


def _pick_tile_b(batch, num_class):
    """Largest batch tile (multiple of 8, capped) whose lane-padded VMEM footprint stays ~8 MiB/buffer."""
    if batch <= _MAX_TILE_B:
        return batch                     # single full block (block dims == array dims)
    # Padded VMEM bytes per 8 rows: pred row-tiles + one label row-tile, each (8,128)*4B.
    row_tiles = (num_class + 127) // 128 + 1
    tile_b = _MAX_TILE_B
    while tile_b > 512 and tile_b * 512 * row_tiles > 8 * 1024 * 1024:
        tile_b //= 2
    return tile_b


def _adv_loss_kernel(pred_ref, target_ref, out_ref, *, kappa, batch, need_mask):
    """pred_ref: (TB, C) float, target_ref: (TB, 1) int32, out_ref: (8, 128) f32 per-tile partial."""
    pred = pred_ref[...].astype(jnp.float32)                       # (TB, C)
    labels = target_ref[...]                                       # (TB, 1) int32
    tb, c = pred.shape

    class_iota = lax.broadcasted_iota(jnp.int32, (tb, c), 1)
    is_target = class_iota == labels                               # (TB, C) bool, one-hot mask

    real = jnp.sum(jnp.where(is_target, pred, 0.0), axis=1, keepdims=True)        # (TB, 1)
    other = jnp.max(jnp.where(is_target, -10000.0, pred), axis=1, keepdims=True)  # (TB, 1)

    diff = other - real
    if kappa != 0.0:
        diff = diff + jnp.float32(kappa)
    loss = jnp.maximum(diff, 0.0)                                  # (TB, 1)

    if need_mask:
        # Last tile may run past the true batch: zero out the padded (garbage) rows.
        row = pl.program_id(0) * tb + lax.broadcasted_iota(jnp.int32, (tb, 1), 0)
        loss = jnp.where(row < batch, loss, 0.0)

    tile_sum = jnp.sum(loss, axis=0, keepdims=True)                # (1, 1) partial sum
    out_ref[...] = jnp.broadcast_to(tile_sum, (8, 128))            # lane-dense replicated store


def get_adv_loss(pred, target, kappa=0.0, mat_diff_loss_scale=0.001):
    """pred: (B, num_class) float, target: (B,) or (B, 1) int labels -> scalar f32 loss."""
    del mat_diff_loss_scale  # unused by the PyTorch forward as well
    batch, num_class = pred.shape
    kappa_f = float(kappa)   # compile-time constant; `+ kappa` elided when 0

    target_col = jnp.reshape(target, (batch, 1)).astype(jnp.int32)

    tile_b = _pick_tile_b(batch, num_class)
    num_tiles = pl.cdiv(batch, tile_b)
    need_mask = (batch % tile_b) != 0

    tile_sums = pl.pallas_call(
        functools.partial(_adv_loss_kernel, kappa=kappa_f, batch=batch,
                          need_mask=need_mask),
        out_shape=jax.ShapeDtypeStruct((8, 128 * num_tiles), jnp.float32),
        grid=(num_tiles,),
        in_specs=[
            pl.BlockSpec((tile_b, num_class), lambda i: (i, 0)),   # pred, native layout
            pl.BlockSpec((tile_b, 1), lambda i: (i, 0)),           # labels
        ],
        out_specs=pl.BlockSpec((8, 128), lambda i: (0, i)),        # per-tile partial sum
        compiler_params=pltpu.CompilerParams(
            dimension_semantics=("parallel",),
            vmem_limit_bytes=32 * 1024 * 1024),
    )(pred, target_col)

    per_tile = tile_sums[0, ::128]                                 # (num_tiles,) tiny gather
    return jnp.sum(per_tile) / batch


def _reference_adv_loss(pred, target, num_class, kappa=0.0):
    pred = pred.astype(jnp.float32)
    tlab = jax.nn.one_hot(jnp.squeeze(target), num_class, dtype=jnp.float32)
    real = jnp.sum(tlab * pred, axis=1)
    other = jnp.max((1.0 - tlab) * pred - tlab * 10000.0, axis=1)
    loss1 = jnp.maximum(0.0, other - real + kappa)
    return jnp.mean(loss1)


if __name__ == "__main__":
    num_class = 16

    key = jax.random.PRNGKey(0)
    k1, k2, k3, k4 = jax.random.split(key, 4)

    # Small check: single tile, kappa = 0.
    pred = jax.random.normal(k1, (8, num_class), dtype=jnp.float32)
    target = jax.random.randint(k2, (8, 1), 0, num_class, dtype=jnp.int32)
    loss = jax.block_until_ready(get_adv_loss(pred, target, kappa=0.0))
    ref = _reference_adv_loss(pred, target, num_class, kappa=0.0)
    assert jnp.allclose(loss, ref, atol=1e-5, rtol=1e-5), (loss, ref)

    # Multi-tile check: exercises the cdiv grid, masked last tile and kappa != 0.
    big_b = _MAX_TILE_B + 8
    pred2 = jax.random.normal(k3, (big_b, num_class), dtype=jnp.float32)
    target2 = jax.random.randint(k4, (big_b,), 0, num_class, dtype=jnp.int32)
    loss2 = jax.block_until_ready(get_adv_loss(pred2, target2, kappa=0.25))
    ref2 = _reference_adv_loss(pred2, target2, num_class, kappa=0.25)
    assert jnp.allclose(loss2, ref2, atol=1e-5, rtol=1e-5), (loss2, ref2)

    print("KERNEL_OK")
</pallas_src>

<mosaic_0001>
module attributes {stable_mosaic.version = 11 : i64} {
  func.func @_adv_loss_kernel(%arg0: i32, %arg1: memref<8x16xf32, #tpu.memory_space<vmem>>, %arg2: memref<8x1xi32, #tpu.memory_space<vmem>>, %arg3: memref<8x128xf32, #tpu.memory_space<vmem>>) attributes {dimension_semantics = [#tpu.dimension_semantics<parallel>], iteration_bounds = array<i64: 1>, scalar_prefetch = 0 : i64, scratch_operands = 0 : i64, tpu.core_type = #tpu.core_type<tc>, window_params = [{transform_indices = @transform_0, window_bounds = array<i64: 8, 16>}, {transform_indices = @transform_1, window_bounds = array<i64: 8, 1>}, {transform_indices = @transform_2, window_bounds = array<i64: 8, 128>}]} {
    %c0 = arith.constant 0 : index
    %c0_0 = arith.constant 0 : index
    %0 = vector.load %arg1[%c0, %c0_0] : memref<8x16xf32, #tpu.memory_space<vmem>>, vector<8x16xf32>
    %c0_1 = arith.constant 0 : index
    %c0_2 = arith.constant 0 : index
    %1 = vector.load %arg2[%c0_1, %c0_2] : memref<8x1xi32, #tpu.memory_space<vmem>>, vector<8x1xi32>
    %2 = tpu.iota {dimensions = array<i32: 1>} : vector<8x16xi32>
    %3 = vector.broadcast %1 : vector<8x1xi32> to vector<8x16xi32>
    %4 = arith.cmpi eq, %2, %3 : vector<8x16xi32>
    %cst = arith.constant 0.000000e+00 : f32
    %5 = vector.broadcast %cst : f32 to vector<8x16xf32>
    %6 = arith.select %4, %0, %5 : vector<8x16xi1>, vector<8x16xf32>
    %cst_3 = arith.constant dense<0.000000e+00> : vector<8xf32>
    %7 = vector.multi_reduction <add>, %6, %cst_3 [1] : vector<8x16xf32> to vector<8xf32>
    %8 = vector.shape_cast %7 : vector<8xf32> to vector<8x1xf32>
    %cst_4 = arith.constant -1.000000e+04 : f32
    %9 = vector.broadcast %cst_4 : f32 to vector<8x16xf32>
    %10 = arith.select %4, %9, %0 : vector<8x16xi1>, vector<8x16xf32>
    %cst_5 = arith.constant dense<0xFF800000> : vector<8xf32>
    %11 = vector.multi_reduction <maximumf>, %10, %cst_5 [1] : vector<8x16xf32> to vector<8xf32>
    %12 = vector.shape_cast %11 : vector<8xf32> to vector<8x1xf32>
    %13 = arith.subf %12, %8 : vector<8x1xf32>
    %cst_6 = arith.constant 0.000000e+00 : f32
    %14 = vector.broadcast %cst_6 : f32 to vector<8x1xf32>
    %15 = arith.maximumf %13, %14 : vector<8x1xf32>
    %cst_7 = arith.constant dense<0.000000e+00> : vector<1xf32>
    %16 = vector.multi_reduction <add>, %15, %cst_7 [0] : vector<8x1xf32> to vector<1xf32>
    %17 = vector.shape_cast %16 : vector<1xf32> to vector<1x1xf32>
    %18 = vector.shape_cast %17 : vector<1x1xf32> to vector<1x1xf32>
    %19 = vector.broadcast %18 : vector<1x1xf32> to vector<8x128xf32>
    %c0_8 = arith.constant 0 : index
    %c0_9 = arith.constant 0 : index
    %20 = vector.load %arg3[%c0_8, %c0_9] : memref<8x128xf32, #tpu.memory_space<vmem>>, vector<8x128xf32>
    tpu.vector_store %arg3[%c0_8, %c0_9], %19 {strides = array<i32>} : memref<8x128xf32, #tpu.memory_space<vmem>>, vector<8x128xf32>,
    return
  }
  func.func @transform_0(%arg0: i32) -> (i32, i32) {
    %c0_i32 = arith.constant 0 : i32
    %c0_i32_0 = arith.constant 0 : i32
    return %arg0, %c0_i32 : i32, i32
  }
  func.func @transform_1(%arg0: i32) -> (i32, i32) {
    %c0_i32 = arith.constant 0 : i32
    %c0_i32_0 = arith.constant 0 : i32
    return %arg0, %c0_i32 : i32, i32
  }
  func.func @transform_2(%arg0: i32) -> (i32, i32) {
    %c0_i32 = arith.constant 0 : i32
    %c0_i32_0 = arith.constant 0 : i32
    return %c0_i32, %arg0 : i32, i32
  }
}

</mosaic_0001>

<llo_original>
// kernel: tpu_custom_call.1
$region0: #{tpu_custom_call.1}
  #allocation0 [shape = 'u32[]', space=smem, size = 0x4, offset = 0x4, fixed_abs, tag = 'smem constant byte address 0x4 - core index']
  #allocation1 [shape = 'u32[72,128]{1,0:T(1,128)}', space=vmem, size = 0x9000, scoped, tag = 'internal scratch']
  %s0 = inlined_call_operand.vmem [shape: f32[8,16], index: 0, kind: input, shape index: {}]
  %s1 = inlined_call_operand.vmem [shape: s32[8,1], index: 1, kind: input, shape index: {}]
  %s2 = inlined_call_operand.hbm [shape: f32[8,128], index: 2, kind: output, shape index: {}]
  %s3 = sld [smem:[#allocation0]]
  $region18: #{tpu_custom_call.1} parent=0
    _
  %s5 = ssub.s32 1, %s3
  %s6 = scalar_select 0, %s5, %s3
  $region1: #{tpu_custom_call.1} parent=0
    #allocation2 [shape = 'u8[4096]{0}', space=vmem, size = 0x1000, scoped, tag = 'output window, operand 0, single buffered']
    #allocation3 [shape = 's32[1]{0}', space=sflag, size = 0x4, scoped, tag = 'scoped memory for tpu_custom_call.1']
    %7 = vsyncpa [#allocation3], 0
    // Predicated region
    $region2: #{tpu_custom_call.1} parent=1 // pred_check
      _
    $region3: #{tpu_custom_call.1} parent=1 // pred_check_branch
      %9 = sbr.rel (0) target = $region5
    $region4: #{tpu_custom_call.1} parent=1 // pred_region
      _
    $region5: #{tpu_custom_call.1} parent=1 // pred_fallthru
      _
    // Predicated region
    $region6: #{tpu_custom_call.1} parent=1 // pred_check
      _
    $region7: #{tpu_custom_call.1} parent=1 // pred_check_branch
      %11 = sbr.rel (0) target = $region9
    $region8: #{tpu_custom_call.1} parent=1 // pred_region
      _
    $region9: #{tpu_custom_call.1} parent=1 // pred_fallthru
      _
    %v12 = vld [vmem:[%s0] sm:$0xff]
    %v13 = vld [vmem:[%s1] sm:$0xff]
    %v14 = vlaneseq
    %v15 = vand.u32 %v14, 127
    %16 = vset.pattern.permute.xlu0 0
    %17 = vperm.xlu0 %16, %v13
    %v18 = vpop.permute.xlu0 %17
    %vm19 = vcmp.eq.s32.totalorder %v15, %v18
    %v20 = vsel %vm19, %v12, 0.0
    %vm21 = vcmask 130048
    %v22 = vsel %vm21, %v20, 0.0
    %23 = vadd.xlane.f32.xlu0 %v22
    %v24 = vpop.xlane.xlu0 %23
    %v25 = vsel %vm19, -10000.0, %v12
    %v26 = vsel %vm21, %v25, -inf
    %27 = vmax.xlane.f32.xlu0 %v26
    %v28 = vpop.xlane.xlu0 %27
    %v29 = vsub.f32 %v28, %v24
    %v30 = vmax.f32 %v29, 0.0
    %v31 = vrot.slane %v30, 4
    %v32 = vadd.f32 %v30, %v31
    %v33 = vrot.slane %v32, 2
    %v34 = vadd.f32 %v32, %v33
    %v35 = vrot.slane %v34, 1
    %v36 = vadd.f32 %v34, %v35
    %37 = vst [vmem:[#allocation2] sm:$0xff] %v36
    // Predicated region
    $region10: #{tpu_custom_call.1} parent=1 // pred_check
      _
    $region11: #{tpu_custom_call.1} parent=1 // pred_check_branch
      %39 = sbr.rel (0) target = $region13
    $region12: #{tpu_custom_call.1} parent=1 // pred_region
      %41 = vsyncadd [#allocation3], 0
      %s43 = sshll.u32 [#allocation2], 4
      %s44 = int_to_ptr.vmem [resolvable:$true] %s43
      %s45 = sshll.u32 %s2, 4
      %s46 = int_to_ptr.hbm [resolvable:$true] %s45
      %48 = dma.vmem_to_hbm [thread:$0]  %s44, 128, %s46, [#allocation3]
    $region13: #{tpu_custom_call.1} parent=1 // pred_fallthru
      _
    // Predicated region
    $region14: #{tpu_custom_call.1} parent=1 // pred_check
      _
    $region15: #{tpu_custom_call.1} parent=1 // pred_check_branch
      %50 = sbr.rel (0) target = $region17
    $region16: #{tpu_custom_call.1} parent=1 // pred_region
      %52 = dma.done [#allocation3], 128
    $region17: #{tpu_custom_call.1} parent=1 // pred_fallthru
      _
    %53 = vsyncpa [#allocation3], 1

</llo_original>
